<compile_context>
chip_gen: v6e
topology: v6e:2x2x1
jax: 0.10.0
libtpu: 0.0.40
codegen_flags: <defaults>
</compile_context>

<pallas_src>
import functools

import jax
import jax.numpy as jnp
from jax.experimental import pallas as pl
from jax.experimental.pallas import tpu as pltpu

HIDDEN = 20      # logical hidden width of the PyTorch module
PAD = 128        # lane-aligned padded width


def _round_up(x, m):
    return ((x + m - 1) // m) * m


def deepnn_kernel(x_ref,
                  w1_ref, b1_ref,
                  w2_ref, b2_ref,
                  w3_ref, b3_ref,
                  w4_ref, b4_ref,
                  o_ref):
    # x_ref: (TILE_N, 1) f32  (already f32 -> no cast needed)
    x = x_ref[...]

    # Layer 1: in_features == 1  ->  outer product on the VPU (broadcast mul),
    # avoids a K=1 MXU pass.  (TILE_N, 1) * (1, 128) -> (TILE_N, 128)
    h = jnp.maximum(x * w1_ref[...] + b1_ref[...], 0.0)

    # Layers 2 and 3: square 128x128 (zero-padded 20x20) matmuls on the MXU.
    h = jnp.maximum(
        jnp.dot(h, w2_ref[...], preferred_element_type=jnp.float32) + b2_ref[...],
        0.0)
    h = jnp.maximum(
        jnp.dot(h, w3_ref[...], preferred_element_type=jnp.float32) + b3_ref[...],
        0.0)

    # Layer 4 folded into the padded slab: only column 0 of w4/b4 is nonzero,
    # so column 0 of the (TILE_N, 128) output is the real result and the store
    # stays lane-dense (no masked vst).  Wrapper slices column 0.
    out = jnp.dot(h, w4_ref[...], preferred_element_type=jnp.float32) + b4_ref[...]
    o_ref[...] = out.astype(o_ref.dtype)


def deepnn_forward(x, padded_params, tile_n=512):
    """x: (N, 1) float32. padded_params: dict of lane-padded weights/biases."""
    n = x.shape[0]
    tile_n = min(tile_n, _round_up(n, 8))      # small batches: one small tile
    n_pad = _round_up(n, tile_n)
    if n_pad != n:
        x = jnp.pad(x, ((0, n_pad - n), (0, 0)))

    p = padded_params
    inputs = (x, p["w1"], p["b1"], p["w2"], p["b2"],
              p["w3"], p["b3"], p["w4"], p["b4"])

    const2d = lambda shape: pl.BlockSpec(shape, lambda i: (0, 0))

    out = pl.pallas_call(
        deepnn_kernel,
        out_shape=jax.ShapeDtypeStruct((n_pad, PAD), jnp.float32),
        grid=(pl.cdiv(n_pad, tile_n),),
        in_specs=[
            pl.BlockSpec((tile_n, 1), lambda i: (i, 0)),   # x: batch-tiled
            const2d((1, PAD)),                             # w1 (row vector)
            const2d((1, PAD)),                             # b1
            const2d((PAD, PAD)),                           # w2
            const2d((1, PAD)),                             # b2
            const2d((PAD, PAD)),                           # w3
            const2d((1, PAD)),                             # b3
            const2d((PAD, PAD)),                           # w4 (only col 0 used)
            const2d((1, PAD)),                             # b4 (only col 0 used)
        ],
        out_specs=pl.BlockSpec((tile_n, PAD), lambda i: (i, 0)),
        compiler_params=pltpu.CompilerParams(
            dimension_semantics=("parallel",)),            # v7x: shard tiles on 2 TCs
    )(*inputs)

    # Free layout plumbing: drop batch padding, keep only the real output column.
    return out[:n, :1]


def init_params(key):
    """PyTorch-default-like Linear init, logical (unpadded) shapes, W as (in, out)."""
    dims = [(1, HIDDEN), (HIDDEN, HIDDEN), (HIDDEN, HIDDEN), (HIDDEN, 1)]
    params = {}
    keys = jax.random.split(key, 2 * len(dims))
    for i, (fan_in, fan_out) in enumerate(dims):
        bound = 1.0 / jnp.sqrt(jnp.float32(fan_in))
        w = jax.random.uniform(keys[2 * i], (fan_in, fan_out), jnp.float32, -bound, bound)
        b = jax.random.uniform(keys[2 * i + 1], (1, fan_out), jnp.float32, -bound, bound)
        params[f"w{i + 1}"] = w
        params[f"b{i + 1}"] = b
    return params


def pad_params(params):
    """Zero-pad hidden dim 20 -> 128 (lane-aligned). Padded channels stay 0 through ReLU."""
    def pad_to(a, shape):
        out = jnp.zeros(shape, a.dtype)
        return out.at[:a.shape[0], :a.shape[1]].set(a)

    return {
        "w1": pad_to(params["w1"], (1, PAD)),
        "b1": pad_to(params["b1"], (1, PAD)),
        "w2": pad_to(params["w2"], (PAD, PAD)),
        "b2": pad_to(params["b2"], (1, PAD)),
        "w3": pad_to(params["w3"], (PAD, PAD)),
        "b3": pad_to(params["b3"], (1, PAD)),
        "w4": pad_to(params["w4"], (PAD, PAD)),   # only column 0 meaningful
        "b4": pad_to(params["b4"], (1, PAD)),     # only column 0 meaningful
    }


def deepnn_reference(x, p):
    h = jnp.maximum(x @ p["w1"] + p["b1"], 0.0)
    h = jnp.maximum(h @ p["w2"] + p["b2"], 0.0)
    h = jnp.maximum(h @ p["w3"] + p["b3"], 0.0)
    return h @ p["w4"] + p["b4"]


if __name__ == "__main__":
    key = jax.random.PRNGKey(0)
    k_x, k_p = jax.random.split(key)

    batch = 8
    x = jax.random.normal(k_x, (batch, 1), jnp.float32)
    params = init_params(k_p)
    pparams = pad_params(params)

    out = deepnn_forward(x, pparams)
    out = jax.block_until_ready(out)

    ref = deepnn_reference(x, params)
    assert out.shape == (batch, 1)
    assert jnp.allclose(out, ref, atol=1e-5, rtol=1e-5)

    # Also exercise a multi-tile, non-divisible batch to check the grid path.
    x_big = jax.random.normal(k_x, (1000, 1), jnp.float32)
    out_big = jax.block_until_ready(deepnn_forward(x_big, pparams, tile_n=512))
    ref_big = deepnn_reference(x_big, params)
    assert out_big.shape == (1000, 1)
    assert jnp.allclose(out_big, ref_big, atol=1e-5, rtol=1e-5)

    print("KERNEL_OK")
</pallas_src>

<mosaic_0001>
module attributes {stable_mosaic.version = 11 : i64} {
  func.func @deepnn_kernel(%arg0: i32, %arg1: memref<8x1xf32, #tpu.memory_space<vmem>>, %arg2: memref<1x128xf32, #tpu.memory_space<vmem>>, %arg3: memref<1x128xf32, #tpu.memory_space<vmem>>, %arg4: memref<128x128xf32, #tpu.memory_space<vmem>>, %arg5: memref<1x128xf32, #tpu.memory_space<vmem>>, %arg6: memref<128x128xf32, #tpu.memory_space<vmem>>, %arg7: memref<1x128xf32, #tpu.memory_space<vmem>>, %arg8: memref<128x128xf32, #tpu.memory_space<vmem>>, %arg9: memref<1x128xf32, #tpu.memory_space<vmem>>, %arg10: memref<8x128xf32, #tpu.memory_space<vmem>>) attributes {dimension_semantics = [#tpu.dimension_semantics<parallel>], iteration_bounds = array<i64: 1>, scalar_prefetch = 0 : i64, scratch_operands = 0 : i64, tpu.core_type = #tpu.core_type<tc>, window_params = [{transform_indices = @transform_0, window_bounds = array<i64: 8, 1>}, {pipeline_mode = #tpu.pipeline_mode<synchronous>, transform_indices = @transform_1, window_bounds = array<i64: 1, 128>}, {pipeline_mode = #tpu.pipeline_mode<synchronous>, transform_indices = @transform_2, window_bounds = array<i64: 1, 128>}, {pipeline_mode = #tpu.pipeline_mode<synchronous>, transform_indices = @transform_3, window_bounds = array<i64: 128, 128>}, {pipeline_mode = #tpu.pipeline_mode<synchronous>, transform_indices = @transform_4, window_bounds = array<i64: 1, 128>}, {pipeline_mode = #tpu.pipeline_mode<synchronous>, transform_indices = @transform_5, window_bounds = array<i64: 128, 128>}, {pipeline_mode = #tpu.pipeline_mode<synchronous>, transform_indices = @transform_6, window_bounds = array<i64: 1, 128>}, {pipeline_mode = #tpu.pipeline_mode<synchronous>, transform_indices = @transform_7, window_bounds = array<i64: 128, 128>}, {pipeline_mode = #tpu.pipeline_mode<synchronous>, transform_indices = @transform_8, window_bounds = array<i64: 1, 128>}, {transform_indices = @transform_9, window_bounds = array<i64: 8, 128>}]} {
    %c0 = arith.constant 0 : index
    %c0_0 = arith.constant 0 : index
    %0 = vector.load %arg1[%c0, %c0_0] : memref<8x1xf32, #tpu.memory_space<vmem>>, vector<8x1xf32>
    %c0_1 = arith.constant 0 : index
    %c0_2 = arith.constant 0 : index
    %1 = vector.load %arg2[%c0_1, %c0_2] : memref<1x128xf32, #tpu.memory_space<vmem>>, vector<1x128xf32>
    %2 = vector.broadcast %0 : vector<8x1xf32> to vector<8x128xf32>
    %3 = vector.broadcast %1 : vector<1x128xf32> to vector<8x128xf32>
    %4 = arith.mulf %2, %3 : vector<8x128xf32>
    %c0_3 = arith.constant 0 : index
    %c0_4 = arith.constant 0 : index
    %5 = vector.load %arg3[%c0_3, %c0_4] : memref<1x128xf32, #tpu.memory_space<vmem>>, vector<1x128xf32>
    %6 = vector.broadcast %5 : vector<1x128xf32> to vector<8x128xf32>
    %7 = arith.addf %4, %6 : vector<8x128xf32>
    %cst = arith.constant 0.000000e+00 : f32
    %8 = vector.broadcast %cst : f32 to vector<8x128xf32>
    %9 = arith.maximumf %7, %8 : vector<8x128xf32>
    %c0_5 = arith.constant 0 : index
    %c0_6 = arith.constant 0 : index
    %10 = vector.load %arg4[%c0_5, %c0_6] : memref<128x128xf32, #tpu.memory_space<vmem>>, vector<128x128xf32>
    %cst_7 = arith.constant dense<0.000000e+00> : vector<8x128xf32>
    %11 = tpu.matmul %9, %10, %cst_7 {dimension_numbers = #tpu.dot_dimension_numbers<[1], [0], [0], [1], [0, 0, 1, 1], [], []>} : vector<8x128xf32>, vector<128x128xf32>, vector<8x128xf32> -> vector<8x128xf32>
    %c0_8 = arith.constant 0 : index
    %c0_9 = arith.constant 0 : index
    %12 = vector.load %arg5[%c0_8, %c0_9] : memref<1x128xf32, #tpu.memory_space<vmem>>, vector<1x128xf32>
    %13 = vector.broadcast %12 : vector<1x128xf32> to vector<8x128xf32>
    %14 = arith.addf %11, %13 : vector<8x128xf32>
    %cst_10 = arith.constant 0.000000e+00 : f32
    %15 = vector.broadcast %cst_10 : f32 to vector<8x128xf32>
    %16 = arith.maximumf %14, %15 : vector<8x128xf32>
    %c0_11 = arith.constant 0 : index
    %c0_12 = arith.constant 0 : index
    %17 = vector.load %arg6[%c0_11, %c0_12] : memref<128x128xf32, #tpu.memory_space<vmem>>, vector<128x128xf32>
    %cst_13 = arith.constant dense<0.000000e+00> : vector<8x128xf32>
    %18 = tpu.matmul %16, %17, %cst_13 {dimension_numbers = #tpu.dot_dimension_numbers<[1], [0], [0], [1], [0, 0, 1, 1], [], []>} : vector<8x128xf32>, vector<128x128xf32>, vector<8x128xf32> -> vector<8x128xf32>
    %c0_14 = arith.constant 0 : index
    %c0_15 = arith.constant 0 : index
    %19 = vector.load %arg7[%c0_14, %c0_15] : memref<1x128xf32, #tpu.memory_space<vmem>>, vector<1x128xf32>
    %20 = vector.broadcast %19 : vector<1x128xf32> to vector<8x128xf32>
    %21 = arith.addf %18, %20 : vector<8x128xf32>
    %cst_16 = arith.constant 0.000000e+00 : f32
    %22 = vector.broadcast %cst_16 : f32 to vector<8x128xf32>
    %23 = arith.maximumf %21, %22 : vector<8x128xf32>
    %c0_17 = arith.constant 0 : index
    %c0_18 = arith.constant 0 : index
    %24 = vector.load %arg8[%c0_17, %c0_18] : memref<128x128xf32, #tpu.memory_space<vmem>>, vector<128x128xf32>
    %cst_19 = arith.constant dense<0.000000e+00> : vector<8x128xf32>
    %25 = tpu.matmul %23, %24, %cst_19 {dimension_numbers = #tpu.dot_dimension_numbers<[1], [0], [0], [1], [0, 0, 1, 1], [], []>} : vector<8x128xf32>, vector<128x128xf32>, vector<8x128xf32> -> vector<8x128xf32>
    %c0_20 = arith.constant 0 : index
    %c0_21 = arith.constant 0 : index
    %26 = vector.load %arg9[%c0_20, %c0_21] : memref<1x128xf32, #tpu.memory_space<vmem>>, vector<1x128xf32>
    %27 = vector.broadcast %26 : vector<1x128xf32> to vector<8x128xf32>
    %28 = arith.addf %25, %27 : vector<8x128xf32>
    %c0_22 = arith.constant 0 : index
    %c0_23 = arith.constant 0 : index
    %29 = vector.load %arg10[%c0_22, %c0_23] : memref<8x128xf32, #tpu.memory_space<vmem>>, vector<8x128xf32>
    tpu.vector_store %arg10[%c0_22, %c0_23], %28 {strides = array<i32>} : memref<8x128xf32, #tpu.memory_space<vmem>>, vector<8x128xf32>,
    return
  }
  func.func @transform_0(%arg0: i32) -> (i32, i32) {
    %c0_i32 = arith.constant 0 : i32
    %c0_i32_0 = arith.constant 0 : i32
    return %arg0, %c0_i32 : i32, i32
  }
  func.func @transform_1(%arg0: i32) -> (i32, i32) {
    %c0_i32 = arith.constant 0 : i32
    %c0_i32_0 = arith.constant 0 : i32
    %c0_i32_1 = arith.constant 0 : i32
    return %c0_i32, %c0_i32_0 : i32, i32
  }
  func.func @transform_2(%arg0: i32) -> (i32, i32) {
    %c0_i32 = arith.constant 0 : i32
    %c0_i32_0 = arith.constant 0 : i32
    %c0_i32_1 = arith.constant 0 : i32
    return %c0_i32, %c0_i32_0 : i32, i32
  }
  func.func @transform_3(%arg0: i32) -> (i32, i32) {
    %c0_i32 = arith.constant 0 : i32
    %c0_i32_0 = arith.constant 0 : i32
    %c0_i32_1 = arith.constant 0 : i32
    return %c0_i32, %c0_i32_0 : i32, i32
  }
  func.func @transform_4(%arg0: i32) -> (i32, i32) {
    %c0_i32 = arith.constant 0 : i32
    %c0_i32_0 = arith.constant 0 : i32
    %c0_i32_1 = arith.constant 0 : i32
    return %c0_i32, %c0_i32_0 : i32, i32
  }
  func.func @transform_5(%arg0: i32) -> (i32, i32) {
    %c0_i32 = arith.constant 0 : i32
    %c0_i32_0 = arith.constant 0 : i32
    %c0_i32_1 = arith.constant 0 : i32
    return %c0_i32, %c0_i32_0 : i32, i32
  }
  func.func @transform_6(%arg0: i32) -> (i32, i32) {
    %c0_i32 = arith.constant 0 : i32
    %c0_i32_0 = arith.constant 0 : i32
    %c0_i32_1 = arith.constant 0 : i32
    return %c0_i32, %c0_i32_0 : i32, i32
  }
  func.func @transform_7(%arg0: i32) -> (i32, i32) {
    %c0_i32 = arith.constant 0 : i32
    %c0_i32_0 = arith.constant 0 : i32
    %c0_i32_1 = arith.constant 0 : i32
    return %c0_i32, %c0_i32_0 : i32, i32
  }
  func.func @transform_8(%arg0: i32) -> (i32, i32) {
    %c0_i32 = arith.constant 0 : i32
    %c0_i32_0 = arith.constant 0 : i32
    %c0_i32_1 = arith.constant 0 : i32
    return %c0_i32, %c0_i32_0 : i32, i32
  }
  func.func @transform_9(%arg0: i32) -> (i32, i32) {
    %c0_i32 = arith.constant 0 : i32
    %c0_i32_0 = arith.constant 0 : i32
    return %arg0, %c0_i32 : i32, i32
  }
}

</mosaic_0001>

<llo_original>
// kernel: tpu_custom_call.1
$region0: #{tpu_custom_call.1}
  #allocation0 [shape = 'u32[]', space=smem, size = 0x4, offset = 0x4, fixed_abs, tag = 'smem constant byte address 0x4 - core index']
  #allocation1 [shape = 'u32[144,128]{1,0:T(1,128)}', space=vmem, size = 0x12000, scoped, tag = 'internal scratch']
  %s0 = inlined_call_operand.vmem [shape: f32[8,1], index: 0, kind: input, shape index: {}]
  %s1 = inlined_call_operand.vmem [shape: f32[1,128], index: 1, kind: input, shape index: {}]
  %s2 = inlined_call_operand.vmem [shape: f32[1,128], index: 2, kind: input, shape index: {}]
  %s3 = inlined_call_operand.hbm [shape: f32[128,128], index: 3, kind: input, shape index: {}]
  %s4 = inlined_call_operand.vmem [shape: f32[1,128], index: 4, kind: input, shape index: {}]
  %s5 = inlined_call_operand.hbm [shape: f32[128,128], index: 5, kind: input, shape index: {}]
  %s6 = inlined_call_operand.vmem [shape: f32[1,128], index: 6, kind: input, shape index: {}]
  %s7 = inlined_call_operand.hbm [shape: f32[128,128], index: 7, kind: input, shape index: {}]
  %s8 = inlined_call_operand.vmem [shape: f32[1,128], index: 8, kind: input, shape index: {}]
  %s9 = inlined_call_operand.hbm [shape: f32[8,128], index: 9, kind: output, shape index: {}]
  %s10 = sld [smem:[#allocation0]]
  $region58: #{tpu_custom_call.1} parent=0
    _
  %s12 = ssub.s32 1, %s10
  %s13 = scalar_select 0, %s12, %s10
  $region1: #{tpu_custom_call.1} parent=0
    #allocation2 [shape = 'u8[65536]{0}', space=vmem, size = 0x10000, scoped, tag = 'input window, operand 3, single buffered']
    #allocation3 [shape = 's32[1]{0}', space=sflag, size = 0x4, scoped, tag = 'scoped memory for tpu_custom_call.1']
    #allocation4 [shape = 's32[1]{0}', space=sflag, size = 0x4, scoped, tag = 'scoped memory for tpu_custom_call.1']
    #allocation5 [shape = 'u8[65536]{0}', space=vmem, size = 0x10000, scoped, tag = 'input window, operand 5, single buffered']
    #allocation6 [shape = 's32[1]{0}', space=sflag, size = 0x4, scoped, tag = 'scoped memory for tpu_custom_call.1']
    #allocation7 [shape = 'u8[65536]{0}', space=vmem, size = 0x10000, scoped, tag = 'input window, operand 7, single buffered']
    #allocation8 [shape = 'u8[4096]{0}', space=vmem, size = 0x1000, scoped, tag = 'output window, operand 0, single buffered']
    %14 = vsyncpa [#allocation3], 0
    %15 = vsyncpa [#allocation6], 0
    %16 = vsyncpa [#allocation4], 0
    // Predicated region
    $region2: #{tpu_custom_call.1} parent=1 // pred_check
      _
    $region3: #{tpu_custom_call.1} parent=1 // pred_check_branch
      %18 = sbr.rel (0) target = $region5
    $region4: #{tpu_custom_call.1} parent=1 // pred_region
      _
    $region5: #{tpu_custom_call.1} parent=1 // pred_fallthru
      _
    // Predicated region
    $region6: #{tpu_custom_call.1} parent=1 // pred_check
      _
    $region7: #{tpu_custom_call.1} parent=1 // pred_check_branch
      %20 = sbr.rel (0) target = $region9
    $region8: #{tpu_custom_call.1} parent=1 // pred_region
      _
    $region9: #{tpu_custom_call.1} parent=1 // pred_fallthru
      _
    // Predicated region
    $region10: #{tpu_custom_call.1} parent=1 // pred_check
      _
    $region11: #{tpu_custom_call.1} parent=1 // pred_check_branch
      %22 = sbr.rel (0) target = $region13
    $region12: #{tpu_custom_call.1} parent=1 // pred_region
      _
    $region13: #{tpu_custom_call.1} parent=1 // pred_fallthru
      _
    // Predicated region
    $region14: #{tpu_custom_call.1} parent=1 // pred_check
      _
    $region15: #{tpu_custom_call.1} parent=1 // pred_check_branch
      %24 = sbr.rel (0) target = $region17
    $region16: #{tpu_custom_call.1} parent=1 // pred_region
      %s26 = ssub.s32 2048, 2048
      %27 = vsyncadd [#allocation3], %s26
      %s28 = sshll.u32 [#allocation2], 4
      %s29 = int_to_ptr.vmem [resolvable:$true] %s28
      %34 = dma.hbm_to_vmem [thread:$0]  %s3, 2048, %s29, [#allocation3], 128, 128, 8
    $region17: #{tpu_custom_call.1} parent=1 // pred_fallthru
      _
    // Predicated region
    $region18: #{tpu_custom_call.1} parent=1 // pred_check
      _
    $region19: #{tpu_custom_call.1} parent=1 // pred_check_branch
      %36 = sbr.rel (0) target = $region21
    $region20: #{tpu_custom_call.1} parent=1 // pred_region
      _
    $region21: #{tpu_custom_call.1} parent=1 // pred_fallthru
      _
    // Predicated region
    $region22: #{tpu_custom_call.1} parent=1 // pred_check
      _
    $region23: #{tpu_custom_call.1} parent=1 // pred_check_branch
      %38 = sbr.rel (0) target = $region25
    $region24: #{tpu_custom_call.1} parent=1 // pred_region
      %s40 = ssub.s32 2048, 2048
      %41 = vsyncadd [#allocation6], %s40
      %s42 = sshll.u32 [#allocation5], 4
      %s43 = int_to_ptr.vmem [resolvable:$true] %s42
      %48 = dma.hbm_to_vmem [thread:$0]  %s5, 2048, %s43, [#allocation6], 128, 128, 8
    $region25: #{tpu_custom_call.1} parent=1 // pred_fallthru
      _
    // Predicated region
    $region26: #{tpu_custom_call.1} parent=1 // pred_check
      _
    $region27: #{tpu_custom_call.1} parent=1 // pred_check_branch
      %50 = sbr.rel (0) target = $region29
    $region28: #{tpu_custom_call.1} parent=1 // pred_region
      _
    $region29: #{tpu_custom_call.1} parent=1 // pred_fallthru
      _
    // Predicated region
    $region30: #{tpu_custom_call.1} parent=1 // pred_check
      _
    $region31: #{tpu_custom_call.1} parent=1 // pred_check_branch
      %52 = sbr.rel (0) target = $region33
    $region32: #{tpu_custom_call.1} parent=1 // pred_region
      %s54 = ssub.s32 2048, 2048
      %55 = vsyncadd [#allocation6], %s54
      %s56 = sshll.u32 [#allocation7], 4
      %s57 = int_to_ptr.vmem [resolvable:$true] %s56
      %62 = dma.hbm_to_vmem [thread:$0]  %s7, 2048, %s57, [#allocation6], 128, 128, 8
    $region33: #{tpu_custom_call.1} parent=1 // pred_fallthru
      _
    // Predicated region
    $region34: #{tpu_custom_call.1} parent=1 // pred_check
      _
    $region35: #{tpu_custom_call.1} parent=1 // pred_check_branch
      %64 = sbr.rel (0) target = $region37
    $region36: #{tpu_custom_call.1} parent=1 // pred_region
      _
    $region37: #{tpu_custom_call.1} parent=1 // pred_fallthru
      _
    // Predicated region
    $region38: #{tpu_custom_call.1} parent=1 // pred_check
      _
    $region39: #{tpu_custom_call.1} parent=1 // pred_check_branch
      %66 = sbr.rel (0) target = $region41
    $region40: #{tpu_custom_call.1} parent=1 // pred_region
      %67 = dma.done [#allocation3], 2048
    $region41: #{tpu_custom_call.1} parent=1 // pred_fallthru
      _
    // Predicated region
    $region42: #{tpu_custom_call.1} parent=1 // pred_check
      _
    $region43: #{tpu_custom_call.1} parent=1 // pred_check_branch
      %69 = sbr.rel (0) target = $region45
    $region44: #{tpu_custom_call.1} parent=1 // pred_region
      %70 = dma.done [#allocation6], 2048
    $region45: #{tpu_custom_call.1} parent=1 // pred_fallthru
      _
    // Predicated region
    $region46: #{tpu_custom_call.1} parent=1 // pred_check
      _
    $region47: #{tpu_custom_call.1} parent=1 // pred_check_branch
      %72 = sbr.rel (0) target = $region49
    $region48: #{tpu_custom_call.1} parent=1 // pred_region
      %73 = dma.done [#allocation6], 2048
    $region49: #{tpu_custom_call.1} parent=1 // pred_fallthru
      _
    %v74 = vld [vmem:[%s0] sm:$0xff]
    %v75 = vld [vmem:[%s1] sm:$0x1]
    %77 = vset.pattern.permute.xlu0 0
    %78 = vperm.xlu0 %77, %v74
    %v79 = vpop.permute.xlu0 %78
    %v82 = vlaneseq
    %v83 = vshrl.u32 %v82, 7
    %v84 = vsub.s32 0, %v83
    %v85 = vrot.slane %v75, %v84
    %v87 = vmul.f32 %v79, %v85
    %v88 = vld [vmem:[%s2] sm:$0x1]
    %v90 = vlaneseq
    %v91 = vshrl.u32 %v90, 7
    %v92 = vsub.s32 0, %v91
    %v93 = vrot.slane %v88, %v92
    %v95 = vadd.f32 %v87, %v93
    %v96 = vmax.f32 %v95, 0.0
    %v97 = vld [vmem:[#allocation2] sm:$0xff]
    %v98 = vld [vmem:[#allocation2 + $0x8] sm:$0xff]
    %v99 = vld [vmem:[#allocation2 + $0x10] sm:$0xff]
    %v100 = vld [vmem:[#allocation2 + $0x18] sm:$0xff]
    %v101 = vld [vmem:[#allocation2 + $0x20] sm:$0xff]
    %v102 = vld [vmem:[#allocation2 + $0x28] sm:$0xff]
    %v103 = vld [vmem:[#allocation2 + $0x30] sm:$0xff]
    %v104 = vld [vmem:[#allocation2 + $0x38] sm:$0xff]
    %v105 = vld [vmem:[#allocation2 + $0x40] sm:$0xff]
    %v106 = vld [vmem:[#allocation2 + $0x48] sm:$0xff]
    %v107 = vld [vmem:[#allocation2 + $0x50] sm:$0xff]
    %v108 = vld [vmem:[#allocation2 + $0x58] sm:$0xff]
    %v109 = vld [vmem:[#allocation2 + $0x60] sm:$0xff]
    %v110 = vld [vmem:[#allocation2 + $0x68] sm:$0xff]
    %v111 = vld [vmem:[#allocation2 + $0x70] sm:$0xff]
    %v112 = vld [vmem:[#allocation2 + $0x78] sm:$0xff]
    %v113 = vld [vmem:[%s4] sm:$0x1]
    %v115 = vlaneseq
    %v116 = vshrl.u32 %v115, 7
    %v117 = vsub.s32 0, %v116
    %v118 = vrot.slane %v113, %v117
    %120 = vmatprep.subr.mxu0 0.0
    %121 = vmatpush1.msra.mxu0 %v112
    %122 = vmatprep.subr.mxu0 0.0
    %123 = vmatpush1.msra.mxu0 %v111
    %124 = vmatprep.subr.mxu0 0.0
    %125 = vmatpush1.msra.mxu0 %v110
    %126 = vmatprep.subr.mxu0 0.0
    %127 = vmatpush1.msra.mxu0 %v109
    %128 = vmatprep.subr.mxu0 0.0
    %129 = vmatpush1.msra.mxu0 %v108
    %130 = vmatprep.subr.mxu0 0.0
    %131 = vmatpush1.msra.mxu0 %v107
    %132 = vmatprep.subr.mxu0 0.0
    %133 = vmatpush1.msra.mxu0 %v106
    %134 = vmatprep.subr.mxu0 0.0
    %135 = vmatpush1.msra.mxu0 %v105
    %136 = vmatprep.subr.mxu0 0.0
    %137 = vmatpush1.msra.mxu0 %v104
    %138 = vmatprep.subr.mxu0 0.0
    %139 = vmatpush1.msra.mxu0 %v103
    %140 = vmatprep.subr.mxu0 0.0
    %141 = vmatpush1.msra.mxu0 %v102
    %142 = vmatprep.subr.mxu0 0.0
    %143 = vmatpush1.msra.mxu0 %v101
    %144 = vmatprep.subr.mxu0 0.0
    %145 = vmatpush1.msra.mxu0 %v100
    %146 = vmatprep.subr.mxu0 0.0
    %147 = vmatpush1.msra.mxu0 %v99
    %148 = vmatprep.subr.mxu0 0.0
    %149 = vmatpush1.msra.mxu0 %v98
    %150 = vmatprep.subr.mxu0 0.0
    %151 = vmatpush1.msra.mxu0 %v97
    %152 = vmatprep.subr.mxu0 0.0
    %153 = vmatpush2.msra.mxu0 0.0
    %154 = vmatprep.subr.mxu0 0.0
    %155 = vmatpush2.msra.mxu0 0.0
    %156 = vmatprep.subr.mxu0 0.0
    %157 = vmatpush2.msra.mxu0 0.0
    %158 = vmatprep.subr.mxu0 0.0
    %159 = vmatpush2.msra.mxu0 0.0
    %160 = vmatprep.subr.mxu0 0.0
    %161 = vmatpush2.msra.mxu0 0.0
    %162 = vmatprep.subr.mxu0 0.0
    %163 = vmatpush2.msra.mxu0 0.0
    %164 = vmatprep.subr.mxu0 0.0
    %165 = vmatpush2.msra.mxu0 0.0
    %166 = vmatprep.subr.mxu0 0.0
    %167 = vmatpush2.msra.mxu0 0.0
    %168 = vmatprep.subr.mxu0 0.0
    %169 = vmatpush2.msra.mxu0 0.0
    %170 = vmatprep.subr.mxu0 0.0
    %171 = vmatpush2.msra.mxu0 0.0
    %172 = vmatprep.subr.mxu0 0.0
    %173 = vmatpush2.msra.mxu0 0.0
    %174 = vmatprep.subr.mxu0 0.0
    %175 = vmatpush2.msra.mxu0 0.0
    %176 = vmatprep.subr.mxu0 0.0
    %177 = vmatpush2.msra.mxu0 0.0
    %178 = vmatprep.subr.mxu0 0.0
    %179 = vmatpush2.msra.mxu0 0.0
    %180 = vmatprep.subr.mxu0 0.0
    %181 = vmatpush2.msra.mxu0 0.0
    %182 = vmatprep.subr.mxu0 0.0
    %183 = vmatpush2.msra.mxu0 0.0
    %184 = vmatprep.mubr.f32.mxu0 0.0
    %185 = vmatmul.mubr.f32.gmra.mxu0 %v96
    %v186 = vpop.f32.mrf.mxu0
    %v187 = vadd.f32 %v118, %v186
    %v188 = vpop.f32.mrf.mxu0
    %189 = vdwg.mxu0
    %v190 = vmax.f32 %v187, 0.0
    %v191 = vld [vmem:[#allocation5] sm:$0xff]
    %v192 = vld [vmem:[#allocation5 + $0x8] sm:$0xff]
    %v193 = vld [vmem:[#allocation5 + $0x10] sm:$0xff]
    %v194 = vld [vmem:[#allocation5 + $0x18] sm:$0xff]
    %v195 = vld [vmem:[#allocation5 + $0x20] sm:$0xff]
    %v196 = vld [vmem:[#allocation5 + $0x28] sm:$0xff]
    %v197 = vld [vmem:[#allocation5 + $0x30] sm:$0xff]
    %v198 = vld [vmem:[#allocation5 + $0x38] sm:$0xff]
    %v199 = vld [vmem:[#allocation5 + $0x40] sm:$0xff]
    %v200 = vld [vmem:[#allocation5 + $0x48] sm:$0xff]
    %v201 = vld [vmem:[#allocation5 + $0x50] sm:$0xff]
    %v202 = vld [vmem:[#allocation5 + $0x58] sm:$0xff]
    %v203 = vld [vmem:[#allocation5 + $0x60] sm:$0xff]
    %v204 = vld [vmem:[#allocation5 + $0x68] sm:$0xff]
    %v205 = vld [vmem:[#allocation5 + $0x70] sm:$0xff]
    %v206 = vld [vmem:[#allocation5 + $0x78] sm:$0xff]
    %v207 = vld [vmem:[%s6] sm:$0x1]
    %v209 = vlaneseq
    %v210 = vshrl.u32 %v209, 7
    %v211 = vsub.s32 0, %v210
    %v212 = vrot.slane %v207, %v211
    %214 = vmatprep.subr.mxu0 0.0
    %215 = vmatpush1.msra.mxu0 %v206
    %216 = vmatprep.subr.mxu0 0.0
    %217 = vmatpush1.msra.mxu0 %v205
    %218 = vmatprep.subr.mxu0 0.0
    %219 = vmatpush1.msra.mxu0 %v204
    %220 = vmatprep.subr.mxu0 0.0
    %221 = vmatpush1.msra.mxu0 %v203
    %222 = vmatprep.subr.mxu0 0.0
    %223 = vmatpush1.msra.mxu0 %v202
    %224 = vmatprep.subr.mxu0 0.0
    %225 = vmatpush1.msra.mxu0 %v201
    %226 = vmatprep.subr.mxu0 0.0
    %227 = vmatpush1.msra.mxu0 %v200
    %228 = vmatprep.subr.mxu0 0.0
    %229 = vmatpush1.msra.mxu0 %v199
    %230 = vmatprep.subr.mxu0 0.0
    %231 = vmatpush1.msra.mxu0 %v198
    %232 = vmatprep.subr.mxu0 0.0
    %233 = vmatpush1.msra.mxu0 %v197
    %234 = vmatprep.subr.mxu0 0.0
    %235 = vmatpush1.msra.mxu0 %v196
    %236 = vmatprep.subr.mxu0 0.0
    %237 = vmatpush1.msra.mxu0 %v195
    %238 = vmatprep.subr.mxu0 0.0
    %239 = vmatpush1.msra.mxu0 %v194
    %240 = vmatprep.subr.mxu0 0.0
    %241 = vmatpush1.msra.mxu0 %v193
    %242 = vmatprep.subr.mxu0 0.0
    %243 = vmatpush1.msra.mxu0 %v192
    %244 = vmatprep.subr.mxu0 0.0
    %245 = vmatpush1.msra.mxu0 %v191
    %246 = vmatprep.subr.mxu0 0.0
    %247 = vmatpush2.msra.mxu0 0.0
    %248 = vmatprep.subr.mxu0 0.0
    %249 = vmatpush2.msra.mxu0 0.0
    %250 = vmatprep.subr.mxu0 0.0
    %251 = vmatpush2.msra.mxu0 0.0
    %252 = vmatprep.subr.mxu0 0.0
    %253 = vmatpush2.msra.mxu0 0.0
    %254 = vmatprep.subr.mxu0 0.0
    %255 = vmatpush2.msra.mxu0 0.0
    %256 = vmatprep.subr.mxu0 0.0
    %257 = vmatpush2.msra.mxu0 0.0
    %258 = vmatprep.subr.mxu0 0.0
    %259 = vmatpush2.msra.mxu0 0.0
    %260 = vmatprep.subr.mxu0 0.0
    %261 = vmatpush2.msra.mxu0 0.0
    %262 = vmatprep.subr.mxu0 0.0
    %263 = vmatpush2.msra.mxu0 0.0
    %264 = vmatprep.subr.mxu0 0.0
    %265 = vmatpush2.msra.mxu0 0.0
    %266 = vmatprep.subr.mxu0 0.0
    %267 = vmatpush2.msra.mxu0 0.0
    %268 = vmatprep.subr.mxu0 0.0
    %269 = vmatpush2.msra.mxu0 0.0
    %270 = vmatprep.subr.mxu0 0.0
    %271 = vmatpush2.msra.mxu0 0.0
    %272 = vmatprep.subr.mxu0 0.0
    %273 = vmatpush2.msra.mxu0 0.0
    %274 = vmatprep.subr.mxu0 0.0
    %275 = vmatpush2.msra.mxu0 0.0
    %276 = vmatprep.subr.mxu0 0.0
    %277 = vmatpush2.msra.mxu0 0.0
    %278 = vmatprep.mubr.f32.mxu0 0.0
    %279 = vmatmul.mubr.f32.gmra.mxu0 %v190
    %v280 = vpop.f32.mrf.mxu0
    %v281 = vadd.f32 %v212, %v280
    %v282 = vpop.f32.mrf.mxu0
    %283 = vdwg.mxu0
    %v284 = vmax.f32 %v281, 0.0
    %v285 = vld [vmem:[#allocation7] sm:$0xff]
    %v286 = vld [vmem:[#allocation7 + $0x8] sm:$0xff]
    %v287 = vld [vmem:[#allocation7 + $0x10] sm:$0xff]
    %v288 = vld [vmem:[#allocation7 + $0x18] sm:$0xff]
    %v289 = vld [vmem:[#allocation7 + $0x20] sm:$0xff]
    %v290 = vld [vmem:[#allocation7 + $0x28] sm:$0xff]
    %v291 = vld [vmem:[#allocation7 + $0x30] sm:$0xff]
    %v292 = vld [vmem:[#allocation7 + $0x38] sm:$0xff]
    %v293 = vld [vmem:[#allocation7 + $0x40] sm:$0xff]
    %v294 = vld [vmem:[#allocation7 + $0x48] sm:$0xff]
    %v295 = vld [vmem:[#allocation7 + $0x50] sm:$0xff]
    %v296 = vld [vmem:[#allocation7 + $0x58] sm:$0xff]
    %v297 = vld [vmem:[#allocation7 + $0x60] sm:$0xff]
    %v298 = vld [vmem:[#allocation7 + $0x68] sm:$0xff]
    %v299 = vld [vmem:[#allocation7 + $0x70] sm:$0xff]
    %v300 = vld [vmem:[#allocation7 + $0x78] sm:$0xff]
    %v301 = vld [vmem:[%s8] sm:$0x1]
    %v303 = vlaneseq
    %v304 = vshrl.u32 %v303, 7
    %v305 = vsub.s32 0, %v304
    %v306 = vrot.slane %v301, %v305
    %308 = vmatprep.subr.mxu0 0.0
    %309 = vmatpush1.msra.mxu0 %v300
    %310 = vmatprep.subr.mxu0 0.0
    %311 = vmatpush1.msra.mxu0 %v299
    %312 = vmatprep.subr.mxu0 0.0
    %313 = vmatpush1.msra.mxu0 %v298
    %314 = vmatprep.subr.mxu0 0.0
    %315 = vmatpush1.msra.mxu0 %v297
    %316 = vmatprep.subr.mxu0 0.0
    %317 = vmatpush1.msra.mxu0 %v296
    %318 = vmatprep.subr.mxu0 0.0
    %319 = vmatpush1.msra.mxu0 %v295
    %320 = vmatprep.subr.mxu0 0.0
    %321 = vmatpush1.msra.mxu0 %v294
    %322 = vmatprep.subr.mxu0 0.0
    %323 = vmatpush1.msra.mxu0 %v293
    %324 = vmatprep.subr.mxu0 0.0
    %325 = vmatpush1.msra.mxu0 %v292
    %326 = vmatprep.subr.mxu0 0.0
    %327 = vmatpush1.msra.mxu0 %v291
    %328 = vmatprep.subr.mxu0 0.0
    %329 = vmatpush1.msra.mxu0 %v290
    %330 = vmatprep.subr.mxu0 0.0
    %331 = vmatpush1.msra.mxu0 %v289
    %332 = vmatprep.subr.mxu0 0.0
    %333 = vmatpush1.msra.mxu0 %v288
    %334 = vmatprep.subr.mxu0 0.0
    %335 = vmatpush1.msra.mxu0 %v287
    %336 = vmatprep.subr.mxu0 0.0
    %337 = vmatpush1.msra.mxu0 %v286
    %338 = vmatprep.subr.mxu0 0.0
    %339 = vmatpush1.msra.mxu0 %v285
    %340 = vmatprep.subr.mxu0 0.0
    %341 = vmatpush2.msra.mxu0 0.0
    %342 = vmatprep.subr.mxu0 0.0
    %343 = vmatpush2.msra.mxu0 0.0
    %344 = vmatprep.subr.mxu0 0.0
    %345 = vmatpush2.msra.mxu0 0.0
    %346 = vmatprep.subr.mxu0 0.0
    %347 = vmatpush2.msra.mxu0 0.0
    %348 = vmatprep.subr.mxu0 0.0
    %349 = vmatpush2.msra.mxu0 0.0
    %350 = vmatprep.subr.mxu0 0.0
    %351 = vmatpush2.msra.mxu0 0.0
    %352 = vmatprep.subr.mxu0 0.0
    %353 = vmatpush2.msra.mxu0 0.0
    %354 = vmatprep.subr.mxu0 0.0
    %355 = vmatpush2.msra.mxu0 0.0
    %356 = vmatprep.subr.mxu0 0.0
    %357 = vmatpush2.msra.mxu0 0.0
    %358 = vmatprep.subr.mxu0 0.0
    %359 = vmatpush2.msra.mxu0 0.0
    %360 = vmatprep.subr.mxu0 0.0
    %361 = vmatpush2.msra.mxu0 0.0
    %362 = vmatprep.subr.mxu0 0.0
    %363 = vmatpush2.msra.mxu0 0.0
    %364 = vmatprep.subr.mxu0 0.0
    %365 = vmatpush2.msra.mxu0 0.0
    %366 = vmatprep.subr.mxu0 0.0
    %367 = vmatpush2.msra.mxu0 0.0
    %368 = vmatprep.subr.mxu0 0.0
    %369 = vmatpush2.msra.mxu0 0.0
    %370 = vmatprep.subr.mxu0 0.0
    %371 = vmatpush2.msra.mxu0 0.0
    %372 = vmatprep.mubr.f32.mxu0 0.0
    %373 = vmatmul.mubr.f32.gmra.mxu0 %v284
    %v374 = vpop.f32.mrf.mxu0
    %v375 = vadd.f32 %v306, %v374
    %v376 = vpop.f32.mrf.mxu0
    %377 = vdwg.mxu0
    %378 = vst [vmem:[#allocation8] sm:$0xff] %v375
    // Predicated region
    $region50: #{tpu_custom_call.1} parent=1 // pred_check
      _
    $region51: #{tpu_custom_call.1} parent=1 // pred_check_branch
      %380 = sbr.rel (0) target = $region53
    $region52: #{tpu_custom_call.1} parent=1 // pred_region
      %s382 = ssub.s32 128, 128
      %383 = vsyncadd [#allocation4], %s382
      %s385 = sshll.u32 [#allocation8], 4
      %s386 = int_to_ptr.vmem [resolvable:$true] %s385
      %388 = dma.vmem_to_hbm [thread:$0]  %s386, 128, %s9, [#allocation4]
    $region53: #{tpu_custom_call.1} parent=1 // pred_fallthru
      _
    // Predicated region
    $region54: #{tpu_custom_call.1} parent=1 // pred_check
      _
    $region55: #{tpu_custom_call.1} parent=1 // pred_check_branch
      %390 = sbr.rel (0) target = $region57
    $region56: #{tpu_custom_call.1} parent=1 // pred_region
      %391 = dma.done [#allocation4], 128
    $region57: #{tpu_custom_call.1} parent=1 // pred_fallthru
      _
    %392 = vsyncpa [#allocation3], 1
    %393 = vsyncpa [#allocation6], 1
    %394 = vsyncpa [#allocation4], 1

</llo_original>
